<compile_context>
chip_gen: v5e
topology: v5e:2x2
jax: 0.10.0
libtpu: 0.0.40
codegen_flags: <defaults>
</compile_context>

<pallas_src>
import functools

import jax
import jax.numpy as jnp
from jax.experimental import pallas as pl
from jax.experimental.pallas import tpu as pltpu


def _pick_block_batch(B, N, target_rows=256):
    """Pick Bb (batch elems per grid step) so Bb*N ~ target_rows, Bb | B, and the
    row-block stays (8,·)-aligned. Keeps multiple 'parallel' grid steps for large B
    (v7x megacore) while amortizing per-step overhead."""
    bb = max(1, min(B, target_rows // max(N, 1)))
    while bb > 1 and B % bb != 0:
        bb -= 1
    if (bb * N) % 8 != 0 and bb != B:
        bb = B  # full-extent block is always a legal block shape
    return bb


def _sattention_kernel(x_ref, wq_ref, wk_ref, wv_ref, wo_ref, o_ref, *,
                       heads, dim_heads, scale, bb, n_tok):
    # x_ref:  (M, D)   with M = bb * n_tok rows = bb whole batch elements
    # wq/wk/wv_ref: (heads, D, dh)   per-head projection weights (resident)
    # wo_ref: (heads, dh, D)         per-head output-projection rows (resident)
    # o_ref:  (M, D)
    m = bb * n_tok
    d = x_ref.shape[-1]
    x = x_ref[...]                                   # compute dtype (bf16 by default)

    y = jnp.zeros((m, d), jnp.float32)               # f32 accumulator over heads
    for h in range(heads):                           # static loop (heads == 3)
        # One big (M, D) x (D, dh) matmul per head/projection — fills the MXU M dim.
        q = jnp.dot(x, wq_ref[h], preferred_element_type=jnp.float32)   # (M, dh) f32
        k = jnp.dot(x, wk_ref[h], preferred_element_type=jnp.float32)
        v = jnp.dot(x, wv_ref[h], preferred_element_type=jnp.float32)

        # Split rows back into (bb, n_tok, dh): leading-dim split, minor dim unchanged.
        qb = (q * scale).reshape(bb, n_tok, dim_heads).astype(x.dtype)  # scale on q
        kb = k.reshape(bb, n_tok, dim_heads).astype(x.dtype)
        vb = v.reshape(bb, n_tok, dim_heads).astype(x.dtype)

        # Per-batch-element attention (batched einsum; tokens never mix across batch).
        dots = jnp.einsum("bnd,bmd->bnm", qb, kb,
                          preferred_element_type=jnp.float32)            # (bb, N, N) f32
        dots = dots - jnp.max(dots, axis=-1, keepdims=True)
        e = jnp.exp(dots)                                                # f32 softmax math
        denom = jnp.sum(e, axis=-1, keepdims=True)                       # (bb, N, 1) f32
        ob = jnp.einsum("bnm,bmd->bnd", e.astype(x.dtype), vb,
                        preferred_element_type=jnp.float32)              # (bb, N, dh) f32
        # Deferred normalization: (e/denom)@v == (e@v) * (1/denom); approx recip -> EUP.
        ob = ob * pl.reciprocal(denom, approx=True)

        # Accumulate output projection per head (no lane-axis concat).
        oh = ob.reshape(m, dim_heads).astype(x.dtype)                    # (M, dh)
        y = y + jnp.dot(oh, wo_ref[h], preferred_element_type=jnp.float32)  # (M, D)

    o_ref[...] = y.astype(o_ref.dtype)


def sattention(x, w_qkv, w_out, *, heads, dim_heads,
               compute_dtype=jnp.bfloat16, target_rows=256):
    """x: (B, N, D); w_qkv: (3*inner, D); w_out: (D, inner)  [PyTorch Linear layout].

    Matmul inputs run in `compute_dtype` (bf16 by default for v6e/v7x MXU; f32
    accumulation + f32 softmax everywhere). Pass compute_dtype=jnp.float32 for
    bit-tighter numerics.
    """
    B, N, D = x.shape
    inner = heads * dim_heads
    scale = dim_heads ** (-0.5)
    # The PyTorch forward's chunk(self.heads) -> (q, k, v) unpack only makes sense
    # for heads == 3; the grouping below encodes exactly that q/k/v split.

    bb = _pick_block_batch(B, N, target_rows)
    m_rows = bb * N
    grid = (B // bb,)

    # ---- wrapper-side weight regrouping (XLA glue, not the hot path) ----
    # to_qkv output features: [q(h0..), k(h0..), v(h0..)], each head slice dh wide.
    wqkv_t = jnp.transpose(w_qkv)                                  # (D, 3*inner)
    wqkv_g = jnp.transpose(wqkv_t.reshape(D, 3, heads, dim_heads),
                           (1, 2, 0, 3))                           # (3, heads, D, dh)
    wq = wqkv_g[0].astype(compute_dtype)                           # (heads, D, dh)
    wk = wqkv_g[1].astype(compute_dtype)
    wv = wqkv_g[2].astype(compute_dtype)
    wo = jnp.transpose(w_out).reshape(heads, dim_heads, D).astype(compute_dtype)

    x2 = x.reshape(B * N, D).astype(compute_dtype)                 # flatten batch*tokens

    kernel = functools.partial(_sattention_kernel, heads=heads, dim_heads=dim_heads,
                               scale=scale, bb=bb, n_tok=N)

    out2 = pl.pallas_call(
        kernel,
        out_shape=jax.ShapeDtypeStruct((B * N, D), x.dtype),
        grid=grid,
        in_specs=[
            pl.BlockSpec((m_rows, D), lambda i: (i, 0)),
            pl.BlockSpec((heads, D, dim_heads), lambda i: (0, 0, 0)),
            pl.BlockSpec((heads, D, dim_heads), lambda i: (0, 0, 0)),
            pl.BlockSpec((heads, D, dim_heads), lambda i: (0, 0, 0)),
            pl.BlockSpec((heads, dim_heads, D), lambda i: (0, 0, 0)),
        ],
        out_specs=pl.BlockSpec((m_rows, D), lambda i: (i, 0)),
        compiler_params=pltpu.CompilerParams(
            dimension_semantics=("parallel",)),
    )(x2, wq, wk, wv, wo)

    return out2.reshape(B, N, D)


def sattention_ref(x, w_qkv, w_out, *, heads, dim_heads):
    """Pure-JAX f32 reference mirroring the PyTorch forward exactly."""
    B, N, D = x.shape
    inner = heads * dim_heads
    scale = dim_heads ** (-0.5)
    qkv = jnp.einsum("bnd,od->bno", x, w_qkv)                # (B, N, 3*inner)
    q_p, k_p, v_p = jnp.split(qkv, 3, axis=-1)               # chunk(heads=3)
    def rearr(t):  # 'b n (h d) -> b h n d'
        return jnp.transpose(t.reshape(B, N, heads, dim_heads), (0, 2, 1, 3))
    q, k, v = rearr(q_p), rearr(k_p), rearr(v_p)
    dots = jnp.einsum("bhnd,bhmd->bhnm", q, k) * scale
    attn = jax.nn.softmax(dots, axis=-1)
    out = jnp.einsum("bhnm,bhmd->bhnd", attn, v)
    out = jnp.transpose(out, (0, 2, 1, 3)).reshape(B, N, inner)
    return jnp.einsum("bni,di->bnd", out, w_out)


if __name__ == "__main__":
    # Small config consistent with the module: dim=32, heads=3, dim_heads=16.
    B, N, D = 2, 8, 32
    heads, dim_heads = 3, 16
    inner = heads * dim_heads

    key = jax.random.PRNGKey(0)
    kx, kq, ko = jax.random.split(key, 3)
    x = jax.random.normal(kx, (B, N, D), dtype=jnp.float32)
    # Synthetic weights in PyTorch Linear layout (out_features, in_features).
    w_qkv = jax.random.normal(kq, (3 * inner, D), dtype=jnp.float32) * 0.05
    w_out = jax.random.normal(ko, (D, inner), dtype=jnp.float32) * 0.05
    # nn.LayerNorm(dim) is declared in __init__ but unused in forward -> omitted.

    y = sattention(x, w_qkv, w_out, heads=heads, dim_heads=dim_heads)
    y = jax.block_until_ready(y)

    y_ref = sattention_ref(x, w_qkv, w_out, heads=heads, dim_heads=dim_heads)
    assert y.shape == (B, N, D)
    # Tolerance loosened for bf16 matmul inputs + approx reciprocal (per review).
    max_err = float(jnp.max(jnp.abs(y - y_ref)))
    assert jnp.allclose(y, y_ref, atol=3e-2, rtol=3e-2), f"mismatch vs reference (max abs err {max_err})"
    print("KERNEL_OK")
</pallas_src>

<mosaic_0001>
module attributes {stable_mosaic.version = 11 : i64} {
  func.func @_sattention_kernel(%arg0: i32, %arg1: memref<16x32xbf16, #tpu.memory_space<vmem>>, %arg2: memref<3x32x16xbf16, #tpu.memory_space<vmem>>, %arg3: memref<3x32x16xbf16, #tpu.memory_space<vmem>>, %arg4: memref<3x32x16xbf16, #tpu.memory_space<vmem>>, %arg5: memref<3x16x32xbf16, #tpu.memory_space<vmem>>, %arg6: memref<16x32xf32, #tpu.memory_space<vmem>>) attributes {dimension_semantics = [#tpu.dimension_semantics<parallel>], iteration_bounds = array<i64: 1>, scalar_prefetch = 0 : i64, scratch_operands = 0 : i64, tpu.core_type = #tpu.core_type<tc>, window_params = [{transform_indices = @transform_0, window_bounds = array<i64: 16, 32>}, {pipeline_mode = #tpu.pipeline_mode<synchronous>, transform_indices = @transform_1, window_bounds = array<i64: 3, 32, 16>}, {pipeline_mode = #tpu.pipeline_mode<synchronous>, transform_indices = @transform_2, window_bounds = array<i64: 3, 32, 16>}, {pipeline_mode = #tpu.pipeline_mode<synchronous>, transform_indices = @transform_3, window_bounds = array<i64: 3, 32, 16>}, {pipeline_mode = #tpu.pipeline_mode<synchronous>, transform_indices = @transform_4, window_bounds = array<i64: 3, 16, 32>}, {transform_indices = @transform_5, window_bounds = array<i64: 16, 32>}]} {
    %c0 = arith.constant 0 : index
    %c0_0 = arith.constant 0 : index
    %0 = vector.load %arg1[%c0, %c0_0] : memref<16x32xbf16, #tpu.memory_space<vmem>>, vector<16x32xbf16>
    %cst = arith.constant 0.000000e+00 : f32
    %1 = vector.broadcast %cst : f32 to vector<16x32xf32>
    %c0_1 = arith.constant 0 : index
    %c0_2 = arith.constant 0 : index
    %c0_3 = arith.constant 0 : index
    %2 = vector.load %arg2[%c0_1, %c0_2, %c0_3] : memref<3x32x16xbf16, #tpu.memory_space<vmem>>, vector<1x32x16xbf16>
    %3 = vector.shape_cast %2 : vector<1x32x16xbf16> to vector<32x16xbf16>
    %cst_4 = arith.constant dense<0.000000e+00> : vector<16x16xf32>
    %4 = tpu.matmul %0, %3, %cst_4 {dimension_numbers = #tpu.dot_dimension_numbers<[1], [0], [0], [1], [0, 0, 1, 1], [], []>} : vector<16x32xbf16>, vector<32x16xbf16>, vector<16x16xf32> -> vector<16x16xf32>
    %c0_5 = arith.constant 0 : index
    %c0_6 = arith.constant 0 : index
    %c0_7 = arith.constant 0 : index
    %5 = vector.load %arg3[%c0_5, %c0_6, %c0_7] : memref<3x32x16xbf16, #tpu.memory_space<vmem>>, vector<1x32x16xbf16>
    %6 = vector.shape_cast %5 : vector<1x32x16xbf16> to vector<32x16xbf16>
    %cst_8 = arith.constant dense<0.000000e+00> : vector<16x16xf32>
    %7 = tpu.matmul %0, %6, %cst_8 {dimension_numbers = #tpu.dot_dimension_numbers<[1], [0], [0], [1], [0, 0, 1, 1], [], []>} : vector<16x32xbf16>, vector<32x16xbf16>, vector<16x16xf32> -> vector<16x16xf32>
    %c0_9 = arith.constant 0 : index
    %c0_10 = arith.constant 0 : index
    %c0_11 = arith.constant 0 : index
    %8 = vector.load %arg4[%c0_9, %c0_10, %c0_11] : memref<3x32x16xbf16, #tpu.memory_space<vmem>>, vector<1x32x16xbf16>
    %9 = vector.shape_cast %8 : vector<1x32x16xbf16> to vector<32x16xbf16>
    %cst_12 = arith.constant dense<0.000000e+00> : vector<16x16xf32>
    %10 = tpu.matmul %0, %9, %cst_12 {dimension_numbers = #tpu.dot_dimension_numbers<[1], [0], [0], [1], [0, 0, 1, 1], [], []>} : vector<16x32xbf16>, vector<32x16xbf16>, vector<16x16xf32> -> vector<16x16xf32>
    %cst_13 = arith.constant 2.500000e-01 : f32
    %11 = vector.broadcast %cst_13 : f32 to vector<16x16xf32>
    %12 = arith.mulf %4, %11 : vector<16x16xf32>
    %13 = vector.shape_cast %12 : vector<16x16xf32> to vector<2x8x16xf32>
    %14 = arith.truncf %13 : vector<2x8x16xf32> to vector<2x8x16xbf16>
    %15 = vector.shape_cast %7 : vector<16x16xf32> to vector<2x8x16xf32>
    %16 = arith.truncf %15 : vector<2x8x16xf32> to vector<2x8x16xbf16>
    %17 = vector.shape_cast %10 : vector<16x16xf32> to vector<2x8x16xf32>
    %18 = arith.truncf %17 : vector<2x8x16xf32> to vector<2x8x16xbf16>
    "tpu.trace_start"() <{level = 10 : i32, message = "bnd,bmd->bnm"}> : () -> ()
    %cst_14 = arith.constant dense<0.000000e+00> : vector<2x8x8xf32>
    %19 = tpu.matmul %14, %16, %cst_14 {dimension_numbers = #tpu.dot_dimension_numbers<[2], [2], [1], [1], [0, 0, 0, 1, 1, 1], [0], [0]>} : vector<2x8x16xbf16>, vector<2x8x16xbf16>, vector<2x8x8xf32> -> vector<2x8x8xf32>
    "tpu.trace_stop"() : () -> ()
    %cst_15 = arith.constant dense<0xFF800000> : vector<2x8xf32>
    %20 = vector.multi_reduction <maximumf>, %19, %cst_15 [2] : vector<2x8x8xf32> to vector<2x8xf32>
    %21 = vector.shape_cast %20 : vector<2x8xf32> to vector<2x8x1xf32>
    %22 = vector.broadcast %21 : vector<2x8x1xf32> to vector<2x8x8xf32>
    %23 = arith.subf %19, %22 : vector<2x8x8xf32>
    %24 = math.exp %23 : vector<2x8x8xf32>
    %cst_16 = arith.constant dense<0.000000e+00> : vector<2x8xf32>
    %25 = vector.multi_reduction <add>, %24, %cst_16 [2] : vector<2x8x8xf32> to vector<2x8xf32>
    %26 = vector.shape_cast %25 : vector<2x8xf32> to vector<2x8x1xf32>
    %27 = arith.truncf %24 : vector<2x8x8xf32> to vector<2x8x8xbf16>
    "tpu.trace_start"() <{level = 10 : i32, message = "bnm,bmd->bnd"}> : () -> ()
    %cst_17 = arith.constant dense<0.000000e+00> : vector<2x8x16xf32>
    %28 = tpu.matmul %27, %18, %cst_17 {dimension_numbers = #tpu.dot_dimension_numbers<[2], [1], [1], [2], [0, 0, 0, 1, 1, 2], [0], [0]>} : vector<2x8x8xbf16>, vector<2x8x16xbf16>, vector<2x8x16xf32> -> vector<2x8x16xf32>
    "tpu.trace_stop"() : () -> ()
    %29 = tpu.reciprocal %26 {approx = true} : vector<2x8x1xf32> -> vector<2x8x1xf32>
    %30 = vector.broadcast %29 : vector<2x8x1xf32> to vector<2x8x16xf32>
    %31 = arith.mulf %28, %30 : vector<2x8x16xf32>
    %32 = vector.shape_cast %31 : vector<2x8x16xf32> to vector<16x16xf32>
    %33 = arith.truncf %32 : vector<16x16xf32> to vector<16x16xbf16>
    %c0_18 = arith.constant 0 : index
    %c0_19 = arith.constant 0 : index
    %c0_20 = arith.constant 0 : index
    %34 = vector.load %arg5[%c0_18, %c0_19, %c0_20] : memref<3x16x32xbf16, #tpu.memory_space<vmem>>, vector<1x16x32xbf16>
    %35 = vector.shape_cast %34 : vector<1x16x32xbf16> to vector<16x32xbf16>
    %cst_21 = arith.constant dense<0.000000e+00> : vector<16x32xf32>
    %36 = tpu.matmul %33, %35, %cst_21 {dimension_numbers = #tpu.dot_dimension_numbers<[1], [0], [0], [1], [0, 0, 1, 1], [], []>} : vector<16x16xbf16>, vector<16x32xbf16>, vector<16x32xf32> -> vector<16x32xf32>
    %37 = arith.addf %1, %36 : vector<16x32xf32>
    %c1 = arith.constant 1 : index
    %c0_22 = arith.constant 0 : index
    %c0_23 = arith.constant 0 : index
    %38 = vector.load %arg2[%c1, %c0_22, %c0_23] : memref<3x32x16xbf16, #tpu.memory_space<vmem>>, vector<1x32x16xbf16>
    %39 = vector.shape_cast %38 : vector<1x32x16xbf16> to vector<32x16xbf16>
    %cst_24 = arith.constant dense<0.000000e+00> : vector<16x16xf32>
    %40 = tpu.matmul %0, %39, %cst_24 {dimension_numbers = #tpu.dot_dimension_numbers<[1], [0], [0], [1], [0, 0, 1, 1], [], []>} : vector<16x32xbf16>, vector<32x16xbf16>, vector<16x16xf32> -> vector<16x16xf32>
    %c1_25 = arith.constant 1 : index
    %c0_26 = arith.constant 0 : index
    %c0_27 = arith.constant 0 : index
    %41 = vector.load %arg3[%c1_25, %c0_26, %c0_27] : memref<3x32x16xbf16, #tpu.memory_space<vmem>>, vector<1x32x16xbf16>
    %42 = vector.shape_cast %41 : vector<1x32x16xbf16> to vector<32x16xbf16>
    %cst_28 = arith.constant dense<0.000000e+00> : vector<16x16xf32>
    %43 = tpu.matmul %0, %42, %cst_28 {dimension_numbers = #tpu.dot_dimension_numbers<[1], [0], [0], [1], [0, 0, 1, 1], [], []>} : vector<16x32xbf16>, vector<32x16xbf16>, vector<16x16xf32> -> vector<16x16xf32>
    %c1_29 = arith.constant 1 : index
    %c0_30 = arith.constant 0 : index
    %c0_31 = arith.constant 0 : index
    %44 = vector.load %arg4[%c1_29, %c0_30, %c0_31] : memref<3x32x16xbf16, #tpu.memory_space<vmem>>, vector<1x32x16xbf16>
    %45 = vector.shape_cast %44 : vector<1x32x16xbf16> to vector<32x16xbf16>
    %cst_32 = arith.constant dense<0.000000e+00> : vector<16x16xf32>
    %46 = tpu.matmul %0, %45, %cst_32 {dimension_numbers = #tpu.dot_dimension_numbers<[1], [0], [0], [1], [0, 0, 1, 1], [], []>} : vector<16x32xbf16>, vector<32x16xbf16>, vector<16x16xf32> -> vector<16x16xf32>
    %cst_33 = arith.constant 2.500000e-01 : f32
    %47 = vector.broadcast %cst_33 : f32 to vector<16x16xf32>
    %48 = arith.mulf %40, %47 : vector<16x16xf32>
    %49 = vector.shape_cast %48 : vector<16x16xf32> to vector<2x8x16xf32>
    %50 = arith.truncf %49 : vector<2x8x16xf32> to vector<2x8x16xbf16>
    %51 = vector.shape_cast %43 : vector<16x16xf32> to vector<2x8x16xf32>
    %52 = arith.truncf %51 : vector<2x8x16xf32> to vector<2x8x16xbf16>
    %53 = vector.shape_cast %46 : vector<16x16xf32> to vector<2x8x16xf32>
    %54 = arith.truncf %53 : vector<2x8x16xf32> to vector<2x8x16xbf16>
    "tpu.trace_start"() <{level = 10 : i32, message = "bnd,bmd->bnm"}> : () -> ()
    %cst_34 = arith.constant dense<0.000000e+00> : vector<2x8x8xf32>
    %55 = tpu.matmul %50, %52, %cst_34 {dimension_numbers = #tpu.dot_dimension_numbers<[2], [2], [1], [1], [0, 0, 0, 1, 1, 1], [0], [0]>} : vector<2x8x16xbf16>, vector<2x8x16xbf16>, vector<2x8x8xf32> -> vector<2x8x8xf32>
    "tpu.trace_stop"() : () -> ()
    %cst_35 = arith.constant dense<0xFF800000> : vector<2x8xf32>
    %56 = vector.multi_reduction <maximumf>, %55, %cst_35 [2] : vector<2x8x8xf32> to vector<2x8xf32>
    %57 = vector.shape_cast %56 : vector<2x8xf32> to vector<2x8x1xf32>
    %58 = vector.broadcast %57 : vector<2x8x1xf32> to vector<2x8x8xf32>
    %59 = arith.subf %55, %58 : vector<2x8x8xf32>
    %60 = math.exp %59 : vector<2x8x8xf32>
    %cst_36 = arith.constant dense<0.000000e+00> : vector<2x8xf32>
    %61 = vector.multi_reduction <add>, %60, %cst_36 [2] : vector<2x8x8xf32> to vector<2x8xf32>
    %62 = vector.shape_cast %61 : vector<2x8xf32> to vector<2x8x1xf32>
    %63 = arith.truncf %60 : vector<2x8x8xf32> to vector<2x8x8xbf16>
    "tpu.trace_start"() <{level = 10 : i32, message = "bnm,bmd->bnd"}> : () -> ()
    %cst_37 = arith.constant dense<0.000000e+00> : vector<2x8x16xf32>
    %64 = tpu.matmul %63, %54, %cst_37 {dimension_numbers = #tpu.dot_dimension_numbers<[2], [1], [1], [2], [0, 0, 0, 1, 1, 2], [0], [0]>} : vector<2x8x8xbf16>, vector<2x8x16xbf16>, vector<2x8x16xf32> -> vector<2x8x16xf32>
    "tpu.trace_stop"() : () -> ()
    %65 = tpu.reciprocal %62 {approx = true} : vector<2x8x1xf32> -> vector<2x8x1xf32>
    %66 = vector.broadcast %65 : vector<2x8x1xf32> to vector<2x8x16xf32>
    %67 = arith.mulf %64, %66 : vector<2x8x16xf32>
    %68 = vector.shape_cast %67 : vector<2x8x16xf32> to vector<16x16xf32>
    %69 = arith.truncf %68 : vector<16x16xf32> to vector<16x16xbf16>
    %c1_38 = arith.constant 1 : index
    %c0_39 = arith.constant 0 : index
    %c0_40 = arith.constant 0 : index
    %70 = vector.load %arg5[%c1_38, %c0_39, %c0_40] : memref<3x16x32xbf16, #tpu.memory_space<vmem>>, vector<1x16x32xbf16>
    %71 = vector.shape_cast %70 : vector<1x16x32xbf16> to vector<16x32xbf16>
    %cst_41 = arith.constant dense<0.000000e+00> : vector<16x32xf32>
    %72 = tpu.matmul %69, %71, %cst_41 {dimension_numbers = #tpu.dot_dimension_numbers<[1], [0], [0], [1], [0, 0, 1, 1], [], []>} : vector<16x16xbf16>, vector<16x32xbf16>, vector<16x32xf32> -> vector<16x32xf32>
    %73 = arith.addf %37, %72 : vector<16x32xf32>
    %c2 = arith.constant 2 : index
    %c0_42 = arith.constant 0 : index
    %c0_43 = arith.constant 0 : index
    %74 = vector.load %arg2[%c2, %c0_42, %c0_43] : memref<3x32x16xbf16, #tpu.memory_space<vmem>>, vector<1x32x16xbf16>
    %75 = vector.shape_cast %74 : vector<1x32x16xbf16> to vector<32x16xbf16>
    %cst_44 = arith.constant dense<0.000000e+00> : vector<16x16xf32>
    %76 = tpu.matmul %0, %75, %cst_44 {dimension_numbers = #tpu.dot_dimension_numbers<[1], [0], [0], [1], [0, 0, 1, 1], [], []>} : vector<16x32xbf16>, vector<32x16xbf16>, vector<16x16xf32> -> vector<16x16xf32>
    %c2_45 = arith.constant 2 : index
    %c0_46 = arith.constant 0 : index
    %c0_47 = arith.constant 0 : index
    %77 = vector.load %arg3[%c2_45, %c0_46, %c0_47] : memref<3x32x16xbf16, #tpu.memory_space<vmem>>, vector<1x32x16xbf16>
    %78 = vector.shape_cast %77 : vector<1x32x16xbf16> to vector<32x16xbf16>
    %cst_48 = arith.constant dense<0.000000e+00> : vector<16x16xf32>
    %79 = tpu.matmul %0, %78, %cst_48 {dimension_numbers = #tpu.dot_dimension_numbers<[1], [0], [0], [1], [0, 0, 1, 1], [], []>} : vector<16x32xbf16>, vector<32x16xbf16>, vector<16x16xf32> -> vector<16x16xf32>
    %c2_49 = arith.constant 2 : index
    %c0_50 = arith.constant 0 : index
    %c0_51 = arith.constant 0 : index
    %80 = vector.load %arg4[%c2_49, %c0_50, %c0_51] : memref<3x32x16xbf16, #tpu.memory_space<vmem>>, vector<1x32x16xbf16>
    %81 = vector.shape_cast %80 : vector<1x32x16xbf16> to vector<32x16xbf16>
    %cst_52 = arith.constant dense<0.000000e+00> : vector<16x16xf32>
    %82 = tpu.matmul %0, %81, %cst_52 {dimension_numbers = #tpu.dot_dimension_numbers<[1], [0], [0], [1], [0, 0, 1, 1], [], []>} : vector<16x32xbf16>, vector<32x16xbf16>, vector<16x16xf32> -> vector<16x16xf32>
    %cst_53 = arith.constant 2.500000e-01 : f32
    %83 = vector.broadcast %cst_53 : f32 to vector<16x16xf32>
    %84 = arith.mulf %76, %83 : vector<16x16xf32>
    %85 = vector.shape_cast %84 : vector<16x16xf32> to vector<2x8x16xf32>
    %86 = arith.truncf %85 : vector<2x8x16xf32> to vector<2x8x16xbf16>
    %87 = vector.shape_cast %79 : vector<16x16xf32> to vector<2x8x16xf32>
    %88 = arith.truncf %87 : vector<2x8x16xf32> to vector<2x8x16xbf16>
    %89 = vector.shape_cast %82 : vector<16x16xf32> to vector<2x8x16xf32>
    %90 = arith.truncf %89 : vector<2x8x16xf32> to vector<2x8x16xbf16>
    "tpu.trace_start"() <{level = 10 : i32, message = "bnd,bmd->bnm"}> : () -> ()
    %cst_54 = arith.constant dense<0.000000e+00> : vector<2x8x8xf32>
    %91 = tpu.matmul %86, %88, %cst_54 {dimension_numbers = #tpu.dot_dimension_numbers<[2], [2], [1], [1], [0, 0, 0, 1, 1, 1], [0], [0]>} : vector<2x8x16xbf16>, vector<2x8x16xbf16>, vector<2x8x8xf32> -> vector<2x8x8xf32>
    "tpu.trace_stop"() : () -> ()
    %cst_55 = arith.constant dense<0xFF800000> : vector<2x8xf32>
    %92 = vector.multi_reduction <maximumf>, %91, %cst_55 [2] : vector<2x8x8xf32> to vector<2x8xf32>
    %93 = vector.shape_cast %92 : vector<2x8xf32> to vector<2x8x1xf32>
    %94 = vector.broadcast %93 : vector<2x8x1xf32> to vector<2x8x8xf32>
    %95 = arith.subf %91, %94 : vector<2x8x8xf32>
    %96 = math.exp %95 : vector<2x8x8xf32>
    %cst_56 = arith.constant dense<0.000000e+00> : vector<2x8xf32>
    %97 = vector.multi_reduction <add>, %96, %cst_56 [2] : vector<2x8x8xf32> to vector<2x8xf32>
    %98 = vector.shape_cast %97 : vector<2x8xf32> to vector<2x8x1xf32>
    %99 = arith.truncf %96 : vector<2x8x8xf32> to vector<2x8x8xbf16>
    "tpu.trace_start"() <{level = 10 : i32, message = "bnm,bmd->bnd"}> : () -> ()
    %cst_57 = arith.constant dense<0.000000e+00> : vector<2x8x16xf32>
    %100 = tpu.matmul %99, %90, %cst_57 {dimension_numbers = #tpu.dot_dimension_numbers<[2], [1], [1], [2], [0, 0, 0, 1, 1, 2], [0], [0]>} : vector<2x8x8xbf16>, vector<2x8x16xbf16>, vector<2x8x16xf32> -> vector<2x8x16xf32>
    "tpu.trace_stop"() : () -> ()
    %101 = tpu.reciprocal %98 {approx = true} : vector<2x8x1xf32> -> vector<2x8x1xf32>
    %102 = vector.broadcast %101 : vector<2x8x1xf32> to vector<2x8x16xf32>
    %103 = arith.mulf %100, %102 : vector<2x8x16xf32>
    %104 = vector.shape_cast %103 : vector<2x8x16xf32> to vector<16x16xf32>
    %105 = arith.truncf %104 : vector<16x16xf32> to vector<16x16xbf16>
    %c2_58 = arith.constant 2 : index
    %c0_59 = arith.constant 0 : index
    %c0_60 = arith.constant 0 : index
    %106 = vector.load %arg5[%c2_58, %c0_59, %c0_60] : memref<3x16x32xbf16, #tpu.memory_space<vmem>>, vector<1x16x32xbf16>
    %107 = vector.shape_cast %106 : vector<1x16x32xbf16> to vector<16x32xbf16>
    %cst_61 = arith.constant dense<0.000000e+00> : vector<16x32xf32>
    %108 = tpu.matmul %105, %107, %cst_61 {dimension_numbers = #tpu.dot_dimension_numbers<[1], [0], [0], [1], [0, 0, 1, 1], [], []>} : vector<16x16xbf16>, vector<16x32xbf16>, vector<16x32xf32> -> vector<16x32xf32>
    %109 = arith.addf %73, %108 : vector<16x32xf32>
    %c0_62 = arith.constant 0 : index
    %c0_63 = arith.constant 0 : index
    %110 = vector.load %arg6[%c0_62, %c0_63] : memref<16x32xf32, #tpu.memory_space<vmem>>, vector<16x32xf32>
    tpu.vector_store %arg6[%c0_62, %c0_63], %109 {strides = array<i32>} : memref<16x32xf32, #tpu.memory_space<vmem>>, vector<16x32xf32>,
    return
  }
  func.func @transform_0(%arg0: i32) -> (i32, i32) {
    %c0_i32 = arith.constant 0 : i32
    %c0_i32_0 = arith.constant 0 : i32
    return %arg0, %c0_i32 : i32, i32
  }
  func.func @transform_1(%arg0: i32) -> (i32, i32, i32) {
    %c0_i32 = arith.constant 0 : i32
    %c0_i32_0 = arith.constant 0 : i32
    %c0_i32_1 = arith.constant 0 : i32
    %c0_i32_2 = arith.constant 0 : i32
    return %c0_i32, %c0_i32_0, %c0_i32_1 : i32, i32, i32
  }
  func.func @transform_2(%arg0: i32) -> (i32, i32, i32) {
    %c0_i32 = arith.constant 0 : i32
    %c0_i32_0 = arith.constant 0 : i32
    %c0_i32_1 = arith.constant 0 : i32
    %c0_i32_2 = arith.constant 0 : i32
    return %c0_i32, %c0_i32_0, %c0_i32_1 : i32, i32, i32
  }
  func.func @transform_3(%arg0: i32) -> (i32, i32, i32) {
    %c0_i32 = arith.constant 0 : i32
    %c0_i32_0 = arith.constant 0 : i32
    %c0_i32_1 = arith.constant 0 : i32
    %c0_i32_2 = arith.constant 0 : i32
    return %c0_i32, %c0_i32_0, %c0_i32_1 : i32, i32, i32
  }
  func.func @transform_4(%arg0: i32) -> (i32, i32, i32) {
    %c0_i32 = arith.constant 0 : i32
    %c0_i32_0 = arith.constant 0 : i32
    %c0_i32_1 = arith.constant 0 : i32
    %c0_i32_2 = arith.constant 0 : i32
    return %c0_i32, %c0_i32_0, %c0_i32_1 : i32, i32, i32
  }
  func.func @transform_5(%arg0: i32) -> (i32, i32) {
    %c0_i32 = arith.constant 0 : i32
    %c0_i32_0 = arith.constant 0 : i32
    return %arg0, %c0_i32 : i32, i32
  }
}

</mosaic_0001>

<llo_original>
// kernel: tpu_custom_call.1
$region0: #{tpu_custom_call.1}
  #allocation0 [shape = 'u32[]', space=smem, size = 0x4, offset = 0x4, fixed_abs, tag = 'smem constant byte address 0x4 - core index']
  #allocation1 [shape = 'u32[72,128]{1,0:T(1,128)}', space=vmem, size = 0x9000, scoped, tag = 'internal scratch']
  %s0 = inlined_call_operand.vmem [shape: bf16[16,32], index: 0, kind: input, shape index: {}]
  %s1 = inlined_call_operand.vmem [shape: bf16[3,32,16], index: 1, kind: input, shape index: {}]
  %s2 = inlined_call_operand.vmem [shape: bf16[3,32,16], index: 2, kind: input, shape index: {}]
  %s3 = inlined_call_operand.vmem [shape: bf16[3,32,16], index: 3, kind: input, shape index: {}]
  %s4 = inlined_call_operand.vmem [shape: bf16[3,16,32], index: 4, kind: input, shape index: {}]
  %s5 = inlined_call_operand.hbm [shape: f32[16,32], index: 5, kind: output, shape index: {}]
  %s6 = sld [smem:[#allocation0]]
  $region30: #{tpu_custom_call.1} parent=0
    _
  %s8 = ssub.s32 1, %s6
  %s9 = scalar_select 0, %s8, %s6
  $region1: #{tpu_custom_call.1} parent=0
    #allocation2 [shape = 'u8[8192]{0}', space=vmem, size = 0x2000, scoped, tag = 'output window, operand 0, single buffered']
    #allocation3 [shape = 's32[1]{0}', space=sflag, size = 0x4, scoped, tag = 'scoped memory for tpu_custom_call.1']
    %10 = vsyncpa [#allocation3], 0
    // Predicated region
    $region2: #{tpu_custom_call.1} parent=1 // pred_check
      _
    $region3: #{tpu_custom_call.1} parent=1 // pred_check_branch
      %12 = sbr.rel (0) target = $region5
    $region4: #{tpu_custom_call.1} parent=1 // pred_region
      _
    $region5: #{tpu_custom_call.1} parent=1 // pred_fallthru
      _
    // Predicated region
    $region6: #{tpu_custom_call.1} parent=1 // pred_check
      _
    $region7: #{tpu_custom_call.1} parent=1 // pred_check_branch
      %14 = sbr.rel (0) target = $region9
    $region8: #{tpu_custom_call.1} parent=1 // pred_region
      _
    $region9: #{tpu_custom_call.1} parent=1 // pred_fallthru
      _
    // Predicated region
    $region10: #{tpu_custom_call.1} parent=1 // pred_check
      _
    $region11: #{tpu_custom_call.1} parent=1 // pred_check_branch
      %16 = sbr.rel (0) target = $region13
    $region12: #{tpu_custom_call.1} parent=1 // pred_region
      _
    $region13: #{tpu_custom_call.1} parent=1 // pred_fallthru
      _
    // Predicated region
    $region14: #{tpu_custom_call.1} parent=1 // pred_check
      _
    $region15: #{tpu_custom_call.1} parent=1 // pred_check_branch
      %18 = sbr.rel (0) target = $region17
    $region16: #{tpu_custom_call.1} parent=1 // pred_region
      _
    $region17: #{tpu_custom_call.1} parent=1 // pred_fallthru
      _
    // Predicated region
    $region18: #{tpu_custom_call.1} parent=1 // pred_check
      _
    $region19: #{tpu_custom_call.1} parent=1 // pred_check_branch
      %20 = sbr.rel (0) target = $region21
    $region20: #{tpu_custom_call.1} parent=1 // pred_region
      _
    $region21: #{tpu_custom_call.1} parent=1 // pred_fallthru
      _
    %v22 = vld [vmem:[%s0] sm:$0xf]
    %v23 = vld [vmem:[%s0 + $0x4] sm:$0xf]
    %v24 = vld [vmem:[%s1] sm:$0xf]
    %v25 = vld [vmem:[%s1 + $0x4] sm:$0xf]
    %v26 = vld [vmem:[%s1 + $0x8] sm:$0xf]
    %v27 = vld [vmem:[%s1 + $0xc] sm:$0xf]
    %v30 = vunpack.c.l.b16 %v22
    %v31 = vunpack.c.l.b16 %v23
    %v32 = vpack.c.b16 %v31, %v30
    %v37 = vunpack.c.l.b16 %v24
    %v38 = vunpack.c.l.b16 %v25
    %v39 = vunpack.c.l.b16 %v26
    %v40 = vunpack.c.l.b16 %v27
    %v41 = vpack.c.b16 %v38, %v37
    %v42 = vpack.c.b16 %v40, %v39
    %vm45 = vcmask 261120
    %v47 = vsel %vm45, %v32, 0
    %49 = vmatpush.bf16.msra.mxu0 0
    %50 = vmatpush.bf16.msra.mxu0 0
    %51 = vmatpush.bf16.msra.mxu0 0
    %52 = vmatpush.bf16.msra.mxu0 0
    %53 = vmatpush.bf16.msra.mxu0 0
    %54 = vmatpush.bf16.msra.mxu0 0
    %55 = vmatpush.bf16.msra.mxu0 %v42
    %56 = vmatpush.bf16.msra.mxu0 %v41
    %57 = vmatmul.bf16.gmra.mxu0 %v47
    %v58 = vpop.f32.mrf.mxu0
    %v59 = vadd.f32 0.0, %v58
    %v60 = vpop.f32.mrf.mxu0
    %v61 = vadd.f32 0.0, %v60
    %62 = vdwg.mxu0
    %v63 = vld [vmem:[%s2] sm:$0xf]
    %v64 = vld [vmem:[%s2 + $0x4] sm:$0xf]
    %v65 = vld [vmem:[%s2 + $0x8] sm:$0xf]
    %v66 = vld [vmem:[%s2 + $0xc] sm:$0xf]
    %v71 = vunpack.c.l.b16 %v63
    %v72 = vunpack.c.l.b16 %v64
    %v73 = vunpack.c.l.b16 %v65
    %v74 = vunpack.c.l.b16 %v66
    %v75 = vpack.c.b16 %v72, %v71
    %v76 = vpack.c.b16 %v74, %v73
    %79 = vmatpush.bf16.msra.mxu0 0
    %80 = vmatpush.bf16.msra.mxu0 0
    %81 = vmatpush.bf16.msra.mxu0 0
    %82 = vmatpush.bf16.msra.mxu0 0
    %83 = vmatpush.bf16.msra.mxu0 0
    %84 = vmatpush.bf16.msra.mxu0 0
    %85 = vmatpush.bf16.msra.mxu0 %v76
    %86 = vmatpush.bf16.msra.mxu0 %v75
    %87 = vmatmul.bf16.gmra.mxu0 %v47
    %v88 = vpop.f32.mrf.mxu0
    %v89 = vadd.f32 0.0, %v88
    %v90 = vpop.f32.mrf.mxu0
    %v91 = vadd.f32 0.0, %v90
    %92 = vdwg.mxu0
    %v93 = vld [vmem:[%s3] sm:$0xf]
    %v94 = vld [vmem:[%s3 + $0x4] sm:$0xf]
    %v95 = vld [vmem:[%s3 + $0x8] sm:$0xf]
    %v96 = vld [vmem:[%s3 + $0xc] sm:$0xf]
    %v101 = vunpack.c.l.b16 %v93
    %v102 = vunpack.c.l.b16 %v94
    %v103 = vunpack.c.l.b16 %v95
    %v104 = vunpack.c.l.b16 %v96
    %v105 = vpack.c.b16 %v102, %v101
    %v106 = vpack.c.b16 %v104, %v103
    %109 = vmatpush.bf16.msra.mxu0 0
    %110 = vmatpush.bf16.msra.mxu0 0
    %111 = vmatpush.bf16.msra.mxu0 0
    %112 = vmatpush.bf16.msra.mxu0 0
    %113 = vmatpush.bf16.msra.mxu0 0
    %114 = vmatpush.bf16.msra.mxu0 0
    %115 = vmatpush.bf16.msra.mxu0 %v106
    %116 = vmatpush.bf16.msra.mxu0 %v105
    %117 = vmatmul.bf16.gmra.mxu0 %v47
    %v118 = vpop.f32.mrf.mxu0
    %v119 = vadd.f32 0.0, %v118
    %v120 = vpop.f32.mrf.mxu0
    %v121 = vadd.f32 0.0, %v120
    %122 = vdwg.mxu0
    %v123 = vmul.f32 %v59, 0.25
    %v124 = vmul.f32 %v61, 0.25
    %v125 = vpack.c.bf16 %v123, %v123
    %v126 = vpack.c.bf16 %v124, %v124
    %v127 = vpack.c.bf16 %v89, %v89
    %v128 = vpack.c.bf16 %v91, %v91
    %v129 = vpack.c.bf16 %v119, %v119
    %v130 = vpack.c.bf16 %v121, %v121
    %vm131 = vcmask 130048
    %v133 = vsel %vm131, %v125, 0
    %v136 = vsel %vm131, %v127, 0
    %138 = vmatpush.bf16.xpose.msra.mxu0 0
    %139 = vmatpush.bf16.xpose.msra.mxu0 0
    %140 = vmatpush.bf16.xpose.msra.mxu0 0
    %141 = vmatpush.bf16.xpose.msra.mxu0 0
    %142 = vmatpush.bf16.xpose.msra.mxu0 0
    %143 = vmatpush.bf16.xpose.msra.mxu0 0
    %144 = vmatpush.bf16.xpose.msra.mxu0 0
    %145 = vmatpush.bf16.xpose.msra.mxu0 %v136
    %146 = vmatmul.bf16.gmra.mxu0 %v133
    %v147 = vpop.f32.mrf.mxu0
    %v148 = vadd.f32 0.0, %v147
    %v149 = vpop.f32.mrf.mxu0
    %150 = vdwg.mxu0
    %v152 = vsel %vm131, %v126, 0
    %v155 = vsel %vm131, %v128, 0
    %157 = vmatpush.bf16.xpose.msra.mxu0 0
    %158 = vmatpush.bf16.xpose.msra.mxu0 0
    %159 = vmatpush.bf16.xpose.msra.mxu0 0
    %160 = vmatpush.bf16.xpose.msra.mxu0 0
    %161 = vmatpush.bf16.xpose.msra.mxu0 0
    %162 = vmatpush.bf16.xpose.msra.mxu0 0
    %163 = vmatpush.bf16.xpose.msra.mxu0 0
    %164 = vmatpush.bf16.xpose.msra.mxu0 %v155
    %165 = vmatmul.bf16.gmra.mxu0 %v152
    %v166 = vpop.f32.mrf.mxu0
    %v167 = vadd.f32 0.0, %v166
    %v168 = vpop.f32.mrf.mxu0
    %169 = vdwg.mxu0
    %vm170 = vcmask 64512
    %v171 = vsel %vm170, %v148, -inf
    %172 = vmax.xlane.f32.xlu0 %v171
    %v173 = vpop.xlane.xlu0 %172
    %v174 = vsel %vm170, %v167, -inf
    %175 = vmax.xlane.f32.xlu0 %v174
    %v176 = vpop.xlane.xlu0 %175
    %v177 = vsub.f32 %v148, %v173
    %v178 = vsub.f32 %v167, %v176
    %v179 = vmul.f32 %v177, 1.442695
    %v180 = vpow.pop %v179
    %v181 = vmul.f32 %v178, 1.442695
    %v182 = vpow.pop %v181
    %v183 = vsel %vm170, %v180, 0.0
    %184 = vadd.xlane.f32.xlu0 %v183
    %v185 = vpop.xlane.xlu0 %184
    %v186 = vsel %vm170, %v182, 0.0
    %187 = vadd.xlane.f32.xlu0 %v186
    %v188 = vpop.xlane.xlu0 %187
    %v189 = vpack.c.bf16 %v180, %v180
    %v190 = vpack.c.bf16 %v182, %v182
    %v192 = vsel %vm170, %v189, 0
    %vm194 = vcmask 1043456
    %v196 = vsel %vm194, %v129, 0
    %198 = vmatpush.bf16.msra.mxu0 0
    %199 = vmatpush.bf16.msra.mxu0 0
    %200 = vmatpush.bf16.msra.mxu0 0
    %201 = vmatpush.bf16.msra.mxu0 0
    %202 = vmatpush.bf16.msra.mxu0 0
    %203 = vmatpush.bf16.msra.mxu0 0
    %204 = vmatpush.bf16.msra.mxu0 0
    %205 = vmatpush.bf16.msra.mxu0 %v196
    %206 = vmatmul.bf16.gmra.mxu0 %v192
    %v207 = vpop.f32.mrf.mxu0
    %v208 = vadd.f32 0.0, %v207
    %v209 = vpop.f32.mrf.mxu0
    %210 = vdwg.mxu0
    %v212 = vsel %vm170, %v190, 0
    %v215 = vsel %vm194, %v130, 0
    %217 = vmatpush.bf16.msra.mxu0 0
    %218 = vmatpush.bf16.msra.mxu0 0
    %219 = vmatpush.bf16.msra.mxu0 0
    %220 = vmatpush.bf16.msra.mxu0 0
    %221 = vmatpush.bf16.msra.mxu0 0
    %222 = vmatpush.bf16.msra.mxu0 0
    %223 = vmatpush.bf16.msra.mxu0 0
    %224 = vmatpush.bf16.msra.mxu0 %v215
    %225 = vmatmul.bf16.gmra.mxu0 %v212
    %v226 = vpop.f32.mrf.mxu0
    %v227 = vadd.f32 0.0, %v226
    %v228 = vpop.f32.mrf.mxu0
    %229 = vdwg.mxu0
    %v230 = vrcp.pop %v185
    %v231 = vrcp.pop %v188
    %v232 = vmul.f32 %v208, %v230
    %v233 = vmul.f32 %v227, %v231
    %v234 = vpack.c.bf16 %v233, %v232
    %v235 = vld [vmem:[%s4] sm:$0xf]
    %v236 = vld [vmem:[%s4 + $0x4] sm:$0xf]
    %s237 = scalar_lea.vmem %s1, 16
    %v238 = vld [vmem:[%s237] sm:$0xf]
    %v239 = vld [vmem:[%s237 + $0x4] sm:$0xf]
    %v240 = vld [vmem:[%s237 + $0x8] sm:$0xf]
    %v241 = vld [vmem:[%s237 + $0xc] sm:$0xf]
    %v246 = vunpack.c.l.b16 %v238
    %v247 = vunpack.c.l.b16 %v239
    %v248 = vunpack.c.l.b16 %v240
    %v249 = vunpack.c.l.b16 %v241
    %v250 = vpack.c.b16 %v247, %v246
    %v251 = vpack.c.b16 %v249, %v248
    %254 = vmatpush.bf16.msra.mxu0 0
    %255 = vmatpush.bf16.msra.mxu0 0
    %256 = vmatpush.bf16.msra.mxu0 0
    %257 = vmatpush.bf16.msra.mxu0 0
    %258 = vmatpush.bf16.msra.mxu0 0
    %259 = vmatpush.bf16.msra.mxu0 0
    %260 = vmatpush.bf16.msra.mxu0 %v251
    %261 = vmatpush.bf16.msra.mxu0 %v250
    %262 = vmatmul.bf16.gmra.mxu0 %v47
    %v263 = vpop.f32.mrf.mxu0
    %v264 = vadd.f32 0.0, %v263
    %v265 = vpop.f32.mrf.mxu0
    %v266 = vadd.f32 0.0, %v265
    %267 = vdwg.mxu0
    %s268 = scalar_lea.vmem %s2, 16
    %v269 = vld [vmem:[%s268] sm:$0xf]
    %v270 = vld [vmem:[%s268 + $0x4] sm:$0xf]
    %v271 = vld [vmem:[%s268 + $0x8] sm:$0xf]
    %v272 = vld [vmem:[%s268 + $0xc] sm:$0xf]
    %v277 = vunpack.c.l.b16 %v269
    %v278 = vunpack.c.l.b16 %v270
    %v279 = vunpack.c.l.b16 %v271
    %v280 = vunpack.c.l.b16 %v272
    %v281 = vpack.c.b16 %v278, %v277
    %v282 = vpack.c.b16 %v280, %v279
    %285 = vmatpush.bf16.msra.mxu0 0
    %286 = vmatpush.bf16.msra.mxu0 0
    %287 = vmatpush.bf16.msra.mxu0 0
    %288 = vmatpush.bf16.msra.mxu0 0
    %289 = vmatpush.bf16.msra.mxu0 0
    %290 = vmatpush.bf16.msra.mxu0 0
    %291 = vmatpush.bf16.msra.mxu0 %v282
    %292 = vmatpush.bf16.msra.mxu0 %v281
    %293 = vmatmul.bf16.gmra.mxu0 %v47
    %v294 = vpop.f32.mrf.mxu0
    %v295 = vadd.f32 0.0, %v294
    %v296 = vpop.f32.mrf.mxu0
    %v297 = vadd.f32 0.0, %v296
    %298 = vdwg.mxu0
    %s299 = scalar_lea.vmem %s3, 16
    %v300 = vld [vmem:[%s299] sm:$0xf]
    %v301 = vld [vmem:[%s299 + $0x4] sm:$0xf]
    %v302 = vld [vmem:[%s299 + $0x8] sm:$0xf]
    %v303 = vld [vmem:[%s299 + $0xc] sm:$0xf]
    %v308 = vunpack.c.l.b16 %v300
    %v309 = vunpack.c.l.b16 %v301
    %v310 = vunpack.c.l.b16 %v302
    %v311 = vunpack.c.l.b16 %v303
    %v312 = vpack.c.b16 %v309, %v308
    %v313 = vpack.c.b16 %v311, %v310
    %316 = vmatpush.bf16.msra.mxu0 0
    %317 = vmatpush.bf16.msra.mxu0 0
    %318 = vmatpush.bf16.msra.mxu0 0
    %319 = vmatpush.bf16.msra.mxu0 0
    %320 = vmatpush.bf16.msra.mxu0 0
    %321 = vmatpush.bf16.msra.mxu0 0
    %322 = vmatpush.bf16.msra.mxu0 %v313
    %323 = vmatpush.bf16.msra.mxu0 %v312
    %324 = vmatmul.bf16.gmra.mxu0 %v47
    %v325 = vpop.f32.mrf.mxu0
    %v326 = vadd.f32 0.0, %v325
    %v327 = vpop.f32.mrf.mxu0
    %v328 = vadd.f32 0.0, %v327
    %329 = vdwg.mxu0
    %v330 = vmul.f32 %v264, 0.25
    %v331 = vmul.f32 %v266, 0.25
    %v332 = vpack.c.bf16 %v330, %v330
    %v333 = vpack.c.bf16 %v331, %v331
    %v334 = vpack.c.bf16 %v295, %v295
    %v335 = vpack.c.bf16 %v297, %v297
    %v336 = vpack.c.bf16 %v326, %v326
    %v337 = vpack.c.bf16 %v328, %v328
    %v339 = vsel %vm131, %v332, 0
    %v342 = vsel %vm131, %v334, 0
    %344 = vmatpush.bf16.xpose.msra.mxu0 0
    %345 = vmatpush.bf16.xpose.msra.mxu0 0
    %346 = vmatpush.bf16.xpose.msra.mxu0 0
    %347 = vmatpush.bf16.xpose.msra.mxu0 0
    %348 = vmatpush.bf16.xpose.msra.mxu0 0
    %349 = vmatpush.bf16.xpose.msra.mxu0 0
    %350 = vmatpush.bf16.xpose.msra.mxu0 0
    %351 = vmatpush.bf16.xpose.msra.mxu0 %v342
    %352 = vmatmul.bf16.gmra.mxu0 %v339
    %v353 = vpop.f32.mrf.mxu0
    %v354 = vadd.f32 0.0, %v353
    %v355 = vpop.f32.mrf.mxu0
    %356 = vdwg.mxu0
    %v358 = vsel %vm131, %v333, 0
    %v361 = vsel %vm131, %v335, 0
    %363 = vmatpush.bf16.xpose.msra.mxu0 0
    %364 = vmatpush.bf16.xpose.msra.mxu0 0
    %365 = vmatpush.bf16.xpose.msra.mxu0 0
    %366 = vmatpush.bf16.xpose.msra.mxu0 0
    %367 = vmatpush.bf16.xpose.msra.mxu0 0
    %368 = vmatpush.bf16.xpose.msra.mxu0 0
    %369 = vmatpush.bf16.xpose.msra.mxu0 0
    %370 = vmatpush.bf16.xpose.msra.mxu0 %v361
    %371 = vmatmul.bf16.gmra.mxu0 %v358
    %v372 = vpop.f32.mrf.mxu0
    %v373 = vadd.f32 0.0, %v372
    %v374 = vpop.f32.mrf.mxu0
    %375 = vdwg.mxu0
    %v376 = vsel %vm170, %v354, -inf
    %377 = vmax.xlane.f32.xlu0 %v376
    %v378 = vpop.xlane.xlu0 %377
    %v379 = vsel %vm170, %v373, -inf
    %380 = vmax.xlane.f32.xlu0 %v379
    %v381 = vpop.xlane.xlu0 %380
    %v382 = vsub.f32 %v354, %v378
    %v383 = vsub.f32 %v373, %v381
    %v384 = vmul.f32 %v382, 1.442695
    %v385 = vpow.pop %v384
    %v386 = vmul.f32 %v383, 1.442695
    %v387 = vpow.pop %v386
    %v388 = vsel %vm170, %v385, 0.0
    %389 = vadd.xlane.f32.xlu0 %v388
    %v390 = vpop.xlane.xlu0 %389
    %v391 = vsel %vm170, %v387, 0.0
    %392 = vadd.xlane.f32.xlu0 %v391
    %v393 = vpop.xlane.xlu0 %392
    %v394 = vpack.c.bf16 %v385, %v385
    %v395 = vpack.c.bf16 %v387, %v387
    %v397 = vsel %vm170, %v394, 0
    %v400 = vsel %vm194, %v336, 0
    %402 = vmatpush.bf16.msra.mxu0 0
    %403 = vmatpush.bf16.msra.mxu0 0
    %404 = vmatpush.bf16.msra.mxu0 0
    %405 = vmatpush.bf16.msra.mxu0 0
    %406 = vmatpush.bf16.msra.mxu0 0
    %407 = vmatpush.bf16.msra.mxu0 0
    %408 = vmatpush.bf16.msra.mxu0 0
    %409 = vmatpush.bf16.msra.mxu0 %v400
    %410 = vmatmul.bf16.gmra.mxu0 %v397
    %v411 = vpop.f32.mrf.mxu0
    %v412 = vadd.f32 0.0, %v411
    %v413 = vpop.f32.mrf.mxu0
    %414 = vdwg.mxu0
    %v416 = vsel %vm170, %v395, 0
    %v419 = vsel %vm194, %v337, 0
    %421 = vmatpush.bf16.msra.mxu0 0
    %422 = vmatpush.bf16.msra.mxu0 0
    %423 = vmatpush.bf16.msra.mxu0 0
    %424 = vmatpush.bf16.msra.mxu0 0
    %425 = vmatpush.bf16.msra.mxu0 0
    %426 = vmatpush.bf16.msra.mxu0 0
    %427 = vmatpush.bf16.msra.mxu0 0
    %428 = vmatpush.bf16.msra.mxu0 %v419
    %429 = vmatmul.bf16.gmra.mxu0 %v416
    %v430 = vpop.f32.mrf.mxu0
    %v431 = vadd.f32 0.0, %v430
    %v432 = vpop.f32.mrf.mxu0
    %433 = vdwg.mxu0
    %v434 = vrcp.pop %v390
    %v435 = vrcp.pop %v393
    %v436 = vmul.f32 %v412, %v434
    %v437 = vmul.f32 %v431, %v435
    %v438 = vpack.c.bf16 %v437, %v436
    %s439 = scalar_lea.vmem %s4, 8
    %v440 = vld [vmem:[%s439] sm:$0xf]
    %v441 = vld [vmem:[%s439 + $0x4] sm:$0xf]
    %v444 = vunpack.c.l.b16 %v440
    %v445 = vunpack.c.l.b16 %v441
    %v446 = vpack.c.b16 %v445, %v444
    %v449 = vsel %vm131, %v438, 0
    %451 = vmatpush.bf16.msra.mxu0 0
    %452 = vmatpush.bf16.msra.mxu0 0
    %453 = vmatpush.bf16.msra.mxu0 0
    %454 = vmatpush.bf16.msra.mxu0 0
    %455 = vmatpush.bf16.msra.mxu0 0
    %456 = vmatpush.bf16.msra.mxu0 0
    %457 = vmatpush.bf16.msra.mxu0 0
    %458 = vmatpush.bf16.msra.mxu0 %v446
    %459 = vmatmul.bf16.gmra.mxu0 %v449
    %v460 = vpop.f32.mrf.mxu0
    %v461 = vadd.f32 0.0, %v460
    %v462 = vpop.f32.mrf.mxu0
    %v463 = vadd.f32 0.0, %v462
    %464 = vdwg.mxu0
    %v467 = vunpack.c.l.b16 %v235
    %v468 = vunpack.c.l.b16 %v236
    %v469 = vpack.c.b16 %v468, %v467
    %v472 = vsel %vm131, %v234, 0
    %474 = vmatpush.bf16.msra.mxu0 0
    %475 = vmatpush.bf16.msra.mxu0 0
    %476 = vmatpush.bf16.msra.mxu0 0
    %477 = vmatpush.bf16.msra.mxu0 0
    %478 = vmatpush.bf16.msra.mxu0 0
    %479 = vmatpush.bf16.msra.mxu0 0
    %480 = vmatpush.bf16.msra.mxu0 0
    %481 = vmatpush.bf16.msra.mxu0 %v469
    %482 = vmatmul.bf16.gmra.mxu0 %v472
    %v483 = vpop.f32.mrf.mxu0
    %v484 = vadd.f32 %v461, %v483
    %v485 = vpop.f32.mrf.mxu0
    %v486 = vadd.f32 %v463, %v485
    %487 = vdwg.mxu0
    %s488 = scalar_lea.vmem %s1, 32
    %v489 = vld [vmem:[%s488] sm:$0xf]
    %v490 = vld [vmem:[%s488 + $0x4] sm:$0xf]
    %v491 = vld [vmem:[%s488 + $0x8] sm:$0xf]
    %v492 = vld [vmem:[%s488 + $0xc] sm:$0xf]
    %v497 = vunpack.c.l.b16 %v489
    %v498 = vunpack.c.l.b16 %v490
    %v499 = vunpack.c.l.b16 %v491
    %v500 = vunpack.c.l.b16 %v492
    %v501 = vpack.c.b16 %v498, %v497
    %v502 = vpack.c.b16 %v500, %v499
    %505 = vmatpush.bf16.msra.mxu0 0
    %506 = vmatpush.bf16.msra.mxu0 0
    %507 = vmatpush.bf16.msra.mxu0 0
    %508 = vmatpush.bf16.msra.mxu0 0
    %509 = vmatpush.bf16.msra.mxu0 0
    %510 = vmatpush.bf16.msra.mxu0 0
    %511 = vmatpush.bf16.msra.mxu0 %v502
    %512 = vmatpush.bf16.msra.mxu0 %v501
    %513 = vmatmul.bf16.gmra.mxu0 %v47
    %v514 = vpop.f32.mrf.mxu0
    %v515 = vadd.f32 0.0, %v514
    %v516 = vpop.f32.mrf.mxu0
    %v517 = vadd.f32 0.0, %v516
    %518 = vdwg.mxu0
    %s519 = scalar_lea.vmem %s2, 32
    %v520 = vld [vmem:[%s519] sm:$0xf]
    %v521 = vld [vmem:[%s519 + $0x4] sm:$0xf]
    %v522 = vld [vmem:[%s519 + $0x8] sm:$0xf]
    %v523 = vld [vmem:[%s519 + $0xc] sm:$0xf]
    %v528 = vunpack.c.l.b16 %v520
    %v529 = vunpack.c.l.b16 %v521
    %v530 = vunpack.c.l.b16 %v522
    %v531 = vunpack.c.l.b16 %v523
    %v532 = vpack.c.b16 %v529, %v528
    %v533 = vpack.c.b16 %v531, %v530
    %536 = vmatpush.bf16.msra.mxu0 0
    %537 = vmatpush.bf16.msra.mxu0 0
    %538 = vmatpush.bf16.msra.mxu0 0
    %539 = vmatpush.bf16.msra.mxu0 0
    %540 = vmatpush.bf16.msra.mxu0 0
    %541 = vmatpush.bf16.msra.mxu0 0
    %542 = vmatpush.bf16.msra.mxu0 %v533
    %543 = vmatpush.bf16.msra.mxu0 %v532
    %544 = vmatmul.bf16.gmra.mxu0 %v47
    %v545 = vpop.f32.mrf.mxu0
    %v546 = vadd.f32 0.0, %v545
    %v547 = vpop.f32.mrf.mxu0
    %v548 = vadd.f32 0.0, %v547
    %549 = vdwg.mxu0
    %s550 = scalar_lea.vmem %s3, 32
    %v551 = vld [vmem:[%s550] sm:$0xf]
    %v552 = vld [vmem:[%s550 + $0x4] sm:$0xf]
    %v553 = vld [vmem:[%s550 + $0x8] sm:$0xf]
    %v554 = vld [vmem:[%s550 + $0xc] sm:$0xf]
    %v559 = vunpack.c.l.b16 %v551
    %v560 = vunpack.c.l.b16 %v552
    %v561 = vunpack.c.l.b16 %v553
    %v562 = vunpack.c.l.b16 %v554
    %v563 = vpack.c.b16 %v560, %v559
    %v564 = vpack.c.b16 %v562, %v561
    %567 = vmatpush.bf16.msra.mxu0 0
    %568 = vmatpush.bf16.msra.mxu0 0
    %569 = vmatpush.bf16.msra.mxu0 0
    %570 = vmatpush.bf16.msra.mxu0 0
    %571 = vmatpush.bf16.msra.mxu0 0
    %572 = vmatpush.bf16.msra.mxu0 0
    %573 = vmatpush.bf16.msra.mxu0 %v564
    %574 = vmatpush.bf16.msra.mxu0 %v563
    %575 = vmatmul.bf16.gmra.mxu0 %v47
    %v576 = vpop.f32.mrf.mxu0
    %v577 = vadd.f32 0.0, %v576
    %v578 = vpop.f32.mrf.mxu0
    %v579 = vadd.f32 0.0, %v578
    %580 = vdwg.mxu0
    %v581 = vmul.f32 %v515, 0.25
    %v582 = vmul.f32 %v517, 0.25
    %v583 = vpack.c.bf16 %v581, %v581
    %v584 = vpack.c.bf16 %v582, %v582
    %v585 = vpack.c.bf16 %v546, %v546
    %v586 = vpack.c.bf16 %v548, %v548
    %v587 = vpack.c.bf16 %v577, %v577
    %v588 = vpack.c.bf16 %v579, %v579
    %v590 = vsel %vm131, %v583, 0
    %v593 = vsel %vm131, %v585, 0
    %595 = vmatpush.bf16.xpose.msra.mxu0 0
    %596 = vmatpush.bf16.xpose.msra.mxu0 0
    %597 = vmatpush.bf16.xpose.msra.mxu0 0
    %598 = vmatpush.bf16.xpose.msra.mxu0 0
    %599 = vmatpush.bf16.xpose.msra.mxu0 0
    %600 = vmatpush.bf16.xpose.msra.mxu0 0
    %601 = vmatpush.bf16.xpose.msra.mxu0 0
    %602 = vmatpush.bf16.xpose.msra.mxu0 %v593
    %603 = vmatmul.bf16.gmra.mxu0 %v590
    %v604 = vpop.f32.mrf.mxu0
    %v605 = vadd.f32 0.0, %v604
    %v606 = vpop.f32.mrf.mxu0
    %607 = vdwg.mxu0
    %v609 = vsel %vm131, %v584, 0
    %v612 = vsel %vm131, %v586, 0
    %614 = vmatpush.bf16.xpose.msra.mxu0 0
    %615 = vmatpush.bf16.xpose.msra.mxu0 0
    %616 = vmatpush.bf16.xpose.msra.mxu0 0
    %617 = vmatpush.bf16.xpose.msra.mxu0 0
    %618 = vmatpush.bf16.xpose.msra.mxu0 0
    %619 = vmatpush.bf16.xpose.msra.mxu0 0
    %620 = vmatpush.bf16.xpose.msra.mxu0 0
    %621 = vmatpush.bf16.xpose.msra.mxu0 %v612
    %622 = vmatmul.bf16.gmra.mxu0 %v609
    %v623 = vpop.f32.mrf.mxu0
    %v624 = vadd.f32 0.0, %v623
    %v625 = vpop.f32.mrf.mxu0
    %626 = vdwg.mxu0
    %v627 = vsel %vm170, %v605, -inf
    %628 = vmax.xlane.f32.xlu0 %v627
    %v629 = vpop.xlane.xlu0 %628
    %v630 = vsel %vm170, %v624, -inf
    %631 = vmax.xlane.f32.xlu0 %v630
    %v632 = vpop.xlane.xlu0 %631
    %v633 = vsub.f32 %v605, %v629
    %v634 = vsub.f32 %v624, %v632
    %v635 = vmul.f32 %v633, 1.442695
    %v636 = vpow.pop %v635
    %v637 = vmul.f32 %v634, 1.442695
    %v638 = vpow.pop %v637
    %v639 = vsel %vm170, %v636, 0.0
    %640 = vadd.xlane.f32.xlu0 %v639
    %v641 = vpop.xlane.xlu0 %640
    %v642 = vsel %vm170, %v638, 0.0
    %643 = vadd.xlane.f32.xlu0 %v642
    %v644 = vpop.xlane.xlu0 %643
    %v645 = vpack.c.bf16 %v636, %v636
    %v646 = vpack.c.bf16 %v638, %v638
    %v648 = vsel %vm170, %v645, 0
    %v651 = vsel %vm194, %v587, 0
    %653 = vmatpush.bf16.msra.mxu0 0
    %654 = vmatpush.bf16.msra.mxu0 0
    %655 = vmatpush.bf16.msra.mxu0 0
    %656 = vmatpush.bf16.msra.mxu0 0
    %657 = vmatpush.bf16.msra.mxu0 0
    %658 = vmatpush.bf16.msra.mxu0 0
    %659 = vmatpush.bf16.msra.mxu0 0
    %660 = vmatpush.bf16.msra.mxu0 %v651
    %661 = vmatmul.bf16.gmra.mxu0 %v648
    %v662 = vpop.f32.mrf.mxu0
    %v663 = vadd.f32 0.0, %v662
    %v664 = vpop.f32.mrf.mxu0
    %665 = vdwg.mxu0
    %v667 = vsel %vm170, %v646, 0
    %v670 = vsel %vm194, %v588, 0
    %672 = vmatpush.bf16.msra.mxu0 0
    %673 = vmatpush.bf16.msra.mxu0 0
    %674 = vmatpush.bf16.msra.mxu0 0
    %675 = vmatpush.bf16.msra.mxu0 0
    %676 = vmatpush.bf16.msra.mxu0 0
    %677 = vmatpush.bf16.msra.mxu0 0
    %678 = vmatpush.bf16.msra.mxu0 0
    %679 = vmatpush.bf16.msra.mxu0 %v670
    %680 = vmatmul.bf16.gmra.mxu0 %v667
    %v681 = vpop.f32.mrf.mxu0
    %v682 = vadd.f32 0.0, %v681
    %v683 = vpop.f32.mrf.mxu0
    %684 = vdwg.mxu0
    %v685 = vrcp.pop %v641
    %v686 = vrcp.pop %v644
    %v687 = vmul.f32 %v663, %v685
    %v688 = vmul.f32 %v682, %v686
    %v689 = vpack.c.bf16 %v688, %v687
    %s690 = scalar_lea.vmem %s4, 16
    %v691 = vld [vmem:[%s690] sm:$0xf]
    %v692 = vld [vmem:[%s690 + $0x4] sm:$0xf]
    %v695 = vunpack.c.l.b16 %v691
    %v696 = vunpack.c.l.b16 %v692
    %v697 = vpack.c.b16 %v696, %v695
    %v700 = vsel %vm131, %v689, 0
    %702 = vmatpush.bf16.msra.mxu0 0
    %703 = vmatpush.bf16.msra.mxu0 0
    %704 = vmatpush.bf16.msra.mxu0 0
    %705 = vmatpush.bf16.msra.mxu0 0
    %706 = vmatpush.bf16.msra.mxu0 0
    %707 = vmatpush.bf16.msra.mxu0 0
    %708 = vmatpush.bf16.msra.mxu0 0
    %709 = vmatpush.bf16.msra.mxu0 %v697
    %710 = vmatmul.bf16.gmra.mxu0 %v700
    %v711 = vpop.f32.mrf.mxu0
    %v712 = vadd.f32 0.0, %v711
    %v713 = vpop.f32.mrf.mxu0
    %v714 = vadd.f32 0.0, %v713
    %715 = vdwg.mxu0
    %v716 = vadd.f32 %v484, %v712
    %v717 = vadd.f32 %v486, %v714
    %718 = vst.msk [vmem:[#allocation2] sm:$0xff] %vm45, %v716
    %719 = vst.msk [vmem:[#allocation2 + $0x8] sm:$0xff] %vm45, %v717
    // Predicated region
    $region22: #{tpu_custom_call.1} parent=1 // pred_check
      _
    $region23: #{tpu_custom_call.1} parent=1 // pred_check_branch
      %721 = sbr.rel (0) target = $region25
    $region24: #{tpu_custom_call.1} parent=1 // pred_region
      %723 = vsyncadd [#allocation3], 0
      %s724 = sshll.u32 [#allocation2], 4
      %s725 = int_to_ptr.vmem [resolvable:$true] %s724
      %s726 = sshll.u32 %s5, 4
      %s727 = int_to_ptr.hbm [resolvable:$true] %s726
      %732 = dma.vmem_to_hbm [thread:$0]  %s725, 256, %s727, [#allocation3], 128, 128, 8
    $region25: #{tpu_custom_call.1} parent=1 // pred_fallthru
      _
    // Predicated region
    $region26: #{tpu_custom_call.1} parent=1 // pred_check
      _
    $region27: #{tpu_custom_call.1} parent=1 // pred_check_branch
      %734 = sbr.rel (0) target = $region29
    $region28: #{tpu_custom_call.1} parent=1 // pred_region
      %736 = dma.done [#allocation3], 256
    $region29: #{tpu_custom_call.1} parent=1 // pred_fallthru
      _
    %737 = vsyncpa [#allocation3], 1

</llo_original>
